<compile_context>
chip_gen: v7x
topology: tpu7x:2x2x1
jax: 0.10.0
libtpu: 0.0.40
codegen_flags: <defaults>
</compile_context>

<pallas_src>
import jax
import jax.numpy as jnp
from jax import lax
from jax.experimental import pallas as pl
from jax.experimental.pallas import tpu as pltpu

N, H, W = 2, 16, 16
C_IN, C_OUT = 4, 8
C_PAD = 8                      # conv1 input channels zero-padded 4 -> 8
M = N * H * W                  # 512 spatial positions, kept on the lane axis
EPS = 1e-5

assert C_PAD == C_OUT, "im2col scratch and masks are shared by both convs"

# Tap order k = dy*3 + dx matches the wrapper-side weight flattening
# (C_OUT, dy, dx, ci) -> (C_OUT, 9*C).
TAP_OFFSETS = tuple((dy - 1) * W + (dx - 1) for dy in range(3) for dx in range(3))
CENTER_TAP = 4                 # (dy, dx) == (1, 1): no shift, mask == 1


def double_conv_kernel(x_ref, w1_ref, w2_ref, bn_ref, mask_ref, o_ref, cols_ref):
    # x_ref   : (C_PAD, M)        channel-major, spatially flat input
    # w1_ref  : (C_OUT, 9*C_PAD)  flattened HWIO weights, k = (dy*3+dx)*C + ci
    # w2_ref  : (C_OUT, 9*C_OUT)
    # bn_ref  : (C_OUT, 4)        columns = [gamma1, beta1, gamma2, beta2]
    # mask_ref: (9*C_PAD, M)      per-tap boundary validity, pre-broadcast over C
    # o_ref   : (C_OUT, M)        lane-dense output
    # cols_ref: (9*C_PAD, M) f32  im2col scratch, reused by both convs

    def conv3x3(af, w_ref):
        # Build the im2col matrix one tap at a time (one XLU roll + one masked
        # multiply per edge tap, bounded live range), then a single MXU matmul.
        for t, off in enumerate(TAP_OFFSETS):
            rows = pl.ds(t * C_PAD, C_PAD)                  # static slice
            if t == CENTER_TAP:
                cols_ref[rows, :] = af
            else:
                shifted = pltpu.roll(af, shift=(-off) % M, axis=1)
                cols_ref[rows, :] = shifted * mask_ref[rows, :]
        return jnp.dot(w_ref[...], cols_ref[...],
                       preferred_element_type=jnp.float32)

    def bn_relu(y, g, be):
        # Training-mode BatchNorm2d (biased variance, eps=1e-5) with centered
        # two-pass statistics and a fused scale/shift + ReLU.  g, be: (C_OUT,1)
        inv_m = 1.0 / M
        mean = jnp.sum(y, axis=1, keepdims=True) * inv_m
        d = y - mean
        var = jnp.sum(d * d, axis=1, keepdims=True) * inv_m
        return jnp.maximum(d * (g * lax.rsqrt(var + EPS)) + be, 0.0)

    y1 = bn_relu(conv3x3(x_ref[...], w1_ref), bn_ref[:, 0:1], bn_ref[:, 1:2])
    y2 = bn_relu(conv3x3(y1, w2_ref), bn_ref[:, 2:3], bn_ref[:, 3:4])
    o_ref[...] = y2


@jax.jit
def double_conv(x_nchw, p):
    # NCHW -> channel-major flat (C, N*H*W); pad channels 4 -> 8.  All pre/post
    # layout work fuses into this jit around the kernel.
    xf = jnp.transpose(x_nchw, (1, 0, 2, 3)).reshape(C_IN, M)
    xf = jnp.pad(xf, ((0, C_PAD - C_IN), (0, 0)))

    w1 = jnp.pad(p['w1'], ((0, 0), (0, 0), (0, C_PAD - C_IN), (0, 0)))
    w1 = jnp.transpose(w1, (3, 0, 1, 2)).reshape(C_OUT, 9 * C_PAD)
    w2 = jnp.transpose(p['w2'], (3, 0, 1, 2)).reshape(C_OUT, 9 * C_OUT)
    bn = jnp.concatenate([p['g1'], p['be1'], p['g2'], p['be2']], axis=0).T  # (C_OUT, 4)
    # Conv biases b1/b2 intentionally not passed: they cancel under
    # training-mode BatchNorm's batch-mean subtraction.

    # Per-tap boundary validity masks (constant w.r.t. inputs -> folded at
    # compile time), pre-broadcast over channels so the kernel does a plain
    # full-width multiply.  These also zero the lanes that pltpu.roll wraps.
    lane = jnp.arange(M, dtype=jnp.int32)
    w_id = lane % W
    h_id = (lane // W) % H
    tap_rows = []
    for dy in range(3):
        for dx in range(3):
            hs = h_id + (dy - 1)
            ws = w_id + (dx - 1)
            tap_rows.append((hs >= 0) & (hs < H) & (ws >= 0) & (ws < W))
    mask = jnp.stack(tap_rows, 0).astype(jnp.float32)                   # (9, M)
    mask = jnp.broadcast_to(mask[:, None, :], (9, C_PAD, M)).reshape(9 * C_PAD, M)

    vmem = pl.BlockSpec(memory_space=pltpu.MemorySpace.VMEM)
    yf = pl.pallas_call(
        double_conv_kernel,
        out_shape=jax.ShapeDtypeStruct((C_OUT, M), jnp.float32),
        in_specs=[vmem] * 5,
        out_specs=vmem,
        scratch_shapes=[pltpu.VMEM((9 * C_PAD, M), jnp.float32)],
    )(xf, w1, w2, bn, mask)

    return jnp.transpose(yf.reshape(C_OUT, N, H, W), (1, 0, 2, 3))   # -> NCHW


def reference(x_nchw, p):
    x = jnp.transpose(x_nchw, (0, 2, 3, 1))

    def conv(x, w, b):
        y = lax.conv_general_dilated(
            x, w, (1, 1), 'SAME',
            dimension_numbers=('NHWC', 'HWIO', 'NHWC'))
        return y + b.reshape(1, 1, 1, -1)

    def bn_relu(y, g, be):
        mean = jnp.mean(y, axis=(0, 1, 2), keepdims=True)
        var = jnp.mean((y - mean) ** 2, axis=(0, 1, 2), keepdims=True)
        y_hat = (y - mean) * lax.rsqrt(var + EPS)
        return jnp.maximum(g.reshape(1, 1, 1, -1) * y_hat
                           + be.reshape(1, 1, 1, -1), 0.0)

    y = bn_relu(conv(x, p['w1'], p['b1']), p['g1'], p['be1'])
    y = bn_relu(conv(y, p['w2'], p['b2']), p['g2'], p['be2'])
    return jnp.transpose(y, (0, 3, 1, 2))


def init_params(key):
    ks = jax.random.split(key, 8)
    fan1 = C_IN * 9
    fan2 = C_OUT * 9
    u = lambda k, s, f: (jax.random.uniform(k, s, jnp.float32, -1.0, 1.0)
                         / jnp.sqrt(jnp.float32(f)))
    return {
        'w1': u(ks[0], (3, 3, C_IN, C_OUT), fan1),
        'b1': u(ks[1], (1, C_OUT), fan1),
        'g1': 1.0 + 0.1 * jax.random.normal(ks[2], (1, C_OUT), jnp.float32),
        'be1': 0.1 * jax.random.normal(ks[3], (1, C_OUT), jnp.float32),
        'w2': u(ks[4], (3, 3, C_OUT, C_OUT), fan2),
        'b2': u(ks[5], (1, C_OUT), fan2),
        'g2': 1.0 + 0.1 * jax.random.normal(ks[6], (1, C_OUT), jnp.float32),
        'be2': 0.1 * jax.random.normal(ks[7], (1, C_OUT), jnp.float32),
    }


if __name__ == "__main__":
    key = jax.random.PRNGKey(0)
    k_x, k_p = jax.random.split(key)
    params = init_params(k_p)
    x = jax.random.normal(k_x, (N, C_IN, H, W), jnp.float32)   # PyTorch NCHW input

    out = jax.block_until_ready(double_conv(x, params))
    ref = jax.block_until_ready(reference(x, params))

    assert out.shape == (N, C_OUT, H, W)
    assert jnp.allclose(out, ref, atol=2e-3, rtol=2e-3), (
        f"max abs err = {float(jnp.max(jnp.abs(out - ref)))}")
    print("KERNEL_OK")
</pallas_src>

<mosaic_0001>
module attributes {stable_mosaic.version = 11 : i64} {
  func.func @double_conv_kernel(%arg0: memref<8x512xf32, #tpu.memory_space<vmem>>, %arg1: memref<8x72xf32, #tpu.memory_space<vmem>>, %arg2: memref<8x72xf32, #tpu.memory_space<vmem>>, %arg3: memref<8x4xf32, #tpu.memory_space<vmem>>, %arg4: memref<72x512xf32, #tpu.memory_space<vmem>>, %arg5: memref<8x512xf32, #tpu.memory_space<vmem>>, %arg6: memref<72x512xf32, #tpu.memory_space<vmem>>) attributes {dimension_semantics = [], scalar_prefetch = 0 : i64, scratch_operands = 1 : i64, tpu.core_type = #tpu.core_type<tc>} {
    %c0 = arith.constant 0 : index
    %c0_0 = arith.constant 0 : index
    %0 = vector.load %arg0[%c0, %c0_0] : memref<8x512xf32, #tpu.memory_space<vmem>>, vector<8x512xf32>
    %c17_i32 = arith.constant 17 : i32
    %1 = tpu.dynamic_rotate %0 by %c17_i32 dim 1 : vector<8x512xf32>, i32 -> vector<8x512xf32>
    %c0_1 = arith.constant 0 : index
    %c0_2 = arith.constant 0 : index
    %2 = vector.load %arg4[%c0_1, %c0_2] : memref<72x512xf32, #tpu.memory_space<vmem>>, vector<8x512xf32>
    %3 = arith.mulf %1, %2 : vector<8x512xf32>
    %c0_3 = arith.constant 0 : index
    %c0_4 = arith.constant 0 : index
    %4 = vector.load %arg6[%c0_3, %c0_4] : memref<72x512xf32, #tpu.memory_space<vmem>>, vector<8x512xf32>
    tpu.vector_store %arg6[%c0_3, %c0_4], %3 {strides = array<i32>} : memref<72x512xf32, #tpu.memory_space<vmem>>, vector<8x512xf32>,
    %c16_i32 = arith.constant 16 : i32
    %5 = tpu.dynamic_rotate %0 by %c16_i32 dim 1 : vector<8x512xf32>, i32 -> vector<8x512xf32>
    %c8 = arith.constant 8 : index
    %c0_5 = arith.constant 0 : index
    %6 = vector.load %arg4[%c8, %c0_5] : memref<72x512xf32, #tpu.memory_space<vmem>>, vector<8x512xf32>
    %7 = arith.mulf %5, %6 : vector<8x512xf32>
    %c8_6 = arith.constant 8 : index
    %c0_7 = arith.constant 0 : index
    %8 = vector.load %arg6[%c8_6, %c0_7] : memref<72x512xf32, #tpu.memory_space<vmem>>, vector<8x512xf32>
    tpu.vector_store %arg6[%c8_6, %c0_7], %7 {strides = array<i32>} : memref<72x512xf32, #tpu.memory_space<vmem>>, vector<8x512xf32>,
    %c15_i32 = arith.constant 15 : i32
    %9 = tpu.dynamic_rotate %0 by %c15_i32 dim 1 : vector<8x512xf32>, i32 -> vector<8x512xf32>
    %c16 = arith.constant 16 : index
    %c0_8 = arith.constant 0 : index
    %10 = vector.load %arg4[%c16, %c0_8] : memref<72x512xf32, #tpu.memory_space<vmem>>, vector<8x512xf32>
    %11 = arith.mulf %9, %10 : vector<8x512xf32>
    %c16_9 = arith.constant 16 : index
    %c0_10 = arith.constant 0 : index
    %12 = vector.load %arg6[%c16_9, %c0_10] : memref<72x512xf32, #tpu.memory_space<vmem>>, vector<8x512xf32>
    tpu.vector_store %arg6[%c16_9, %c0_10], %11 {strides = array<i32>} : memref<72x512xf32, #tpu.memory_space<vmem>>, vector<8x512xf32>,
    %c1_i32 = arith.constant 1 : i32
    %13 = tpu.dynamic_rotate %0 by %c1_i32 dim 1 : vector<8x512xf32>, i32 -> vector<8x512xf32>
    %c24 = arith.constant 24 : index
    %c0_11 = arith.constant 0 : index
    %14 = vector.load %arg4[%c24, %c0_11] : memref<72x512xf32, #tpu.memory_space<vmem>>, vector<8x512xf32>
    %15 = arith.mulf %13, %14 : vector<8x512xf32>
    %c24_12 = arith.constant 24 : index
    %c0_13 = arith.constant 0 : index
    %16 = vector.load %arg6[%c24_12, %c0_13] : memref<72x512xf32, #tpu.memory_space<vmem>>, vector<8x512xf32>
    tpu.vector_store %arg6[%c24_12, %c0_13], %15 {strides = array<i32>} : memref<72x512xf32, #tpu.memory_space<vmem>>, vector<8x512xf32>,
    %c32 = arith.constant 32 : index
    %c0_14 = arith.constant 0 : index
    %17 = vector.load %arg6[%c32, %c0_14] : memref<72x512xf32, #tpu.memory_space<vmem>>, vector<8x512xf32>
    tpu.vector_store %arg6[%c32, %c0_14], %0 {strides = array<i32>} : memref<72x512xf32, #tpu.memory_space<vmem>>, vector<8x512xf32>,
    %c511_i32 = arith.constant 511 : i32
    %18 = tpu.dynamic_rotate %0 by %c511_i32 dim 1 : vector<8x512xf32>, i32 -> vector<8x512xf32>
    %c40 = arith.constant 40 : index
    %c0_15 = arith.constant 0 : index
    %19 = vector.load %arg4[%c40, %c0_15] : memref<72x512xf32, #tpu.memory_space<vmem>>, vector<8x512xf32>
    %20 = arith.mulf %18, %19 : vector<8x512xf32>
    %c40_16 = arith.constant 40 : index
    %c0_17 = arith.constant 0 : index
    %21 = vector.load %arg6[%c40_16, %c0_17] : memref<72x512xf32, #tpu.memory_space<vmem>>, vector<8x512xf32>
    tpu.vector_store %arg6[%c40_16, %c0_17], %20 {strides = array<i32>} : memref<72x512xf32, #tpu.memory_space<vmem>>, vector<8x512xf32>,
    %c497_i32 = arith.constant 497 : i32
    %22 = tpu.dynamic_rotate %0 by %c497_i32 dim 1 : vector<8x512xf32>, i32 -> vector<8x512xf32>
    %c48 = arith.constant 48 : index
    %c0_18 = arith.constant 0 : index
    %23 = vector.load %arg4[%c48, %c0_18] : memref<72x512xf32, #tpu.memory_space<vmem>>, vector<8x512xf32>
    %24 = arith.mulf %22, %23 : vector<8x512xf32>
    %c48_19 = arith.constant 48 : index
    %c0_20 = arith.constant 0 : index
    %25 = vector.load %arg6[%c48_19, %c0_20] : memref<72x512xf32, #tpu.memory_space<vmem>>, vector<8x512xf32>
    tpu.vector_store %arg6[%c48_19, %c0_20], %24 {strides = array<i32>} : memref<72x512xf32, #tpu.memory_space<vmem>>, vector<8x512xf32>,
    %c496_i32 = arith.constant 496 : i32
    %26 = tpu.dynamic_rotate %0 by %c496_i32 dim 1 : vector<8x512xf32>, i32 -> vector<8x512xf32>
    %c56 = arith.constant 56 : index
    %c0_21 = arith.constant 0 : index
    %27 = vector.load %arg4[%c56, %c0_21] : memref<72x512xf32, #tpu.memory_space<vmem>>, vector<8x512xf32>
    %28 = arith.mulf %26, %27 : vector<8x512xf32>
    %c56_22 = arith.constant 56 : index
    %c0_23 = arith.constant 0 : index
    %29 = vector.load %arg6[%c56_22, %c0_23] : memref<72x512xf32, #tpu.memory_space<vmem>>, vector<8x512xf32>
    tpu.vector_store %arg6[%c56_22, %c0_23], %28 {strides = array<i32>} : memref<72x512xf32, #tpu.memory_space<vmem>>, vector<8x512xf32>,
    %c495_i32 = arith.constant 495 : i32
    %30 = tpu.dynamic_rotate %0 by %c495_i32 dim 1 : vector<8x512xf32>, i32 -> vector<8x512xf32>
    %c64 = arith.constant 64 : index
    %c0_24 = arith.constant 0 : index
    %31 = vector.load %arg4[%c64, %c0_24] : memref<72x512xf32, #tpu.memory_space<vmem>>, vector<8x512xf32>
    %32 = arith.mulf %30, %31 : vector<8x512xf32>
    %c64_25 = arith.constant 64 : index
    %c0_26 = arith.constant 0 : index
    %33 = vector.load %arg6[%c64_25, %c0_26] : memref<72x512xf32, #tpu.memory_space<vmem>>, vector<8x512xf32>
    tpu.vector_store %arg6[%c64_25, %c0_26], %32 {strides = array<i32>} : memref<72x512xf32, #tpu.memory_space<vmem>>, vector<8x512xf32>,
    %c0_27 = arith.constant 0 : index
    %c0_28 = arith.constant 0 : index
    %34 = vector.load %arg1[%c0_27, %c0_28] : memref<8x72xf32, #tpu.memory_space<vmem>>, vector<8x72xf32>
    %c0_29 = arith.constant 0 : index
    %c0_30 = arith.constant 0 : index
    %35 = vector.load %arg6[%c0_29, %c0_30] : memref<72x512xf32, #tpu.memory_space<vmem>>, vector<72x512xf32>
    %cst = arith.constant dense<0.000000e+00> : vector<8x512xf32>
    %36 = tpu.matmul %34, %35, %cst {dimension_numbers = #tpu.dot_dimension_numbers<[1], [0], [0], [1], [0, 0, 1, 1], [], []>} : vector<8x72xf32>, vector<72x512xf32>, vector<8x512xf32> -> vector<8x512xf32>
    %c0_31 = arith.constant 0 : index
    %c0_32 = arith.constant 0 : index
    %37 = vector.load %arg3[%c0_31, %c0_32] : memref<8x4xf32, #tpu.memory_space<vmem>>, vector<8x1xf32>
    %c0_33 = arith.constant 0 : index
    %c1 = arith.constant 1 : index
    %38 = vector.load %arg3[%c0_33, %c1] : memref<8x4xf32, #tpu.memory_space<vmem>>, vector<8x1xf32>
    %cst_34 = arith.constant dense<0.000000e+00> : vector<8xf32>
    %39 = vector.multi_reduction <add>, %36, %cst_34 [1] : vector<8x512xf32> to vector<8xf32>
    %40 = vector.shape_cast %39 : vector<8xf32> to vector<8x1xf32>
    %cst_35 = arith.constant 0.001953125 : f32
    %41 = vector.broadcast %cst_35 : f32 to vector<8x1xf32>
    %42 = arith.mulf %40, %41 : vector<8x1xf32>
    %43 = vector.broadcast %42 : vector<8x1xf32> to vector<8x512xf32>
    %44 = arith.subf %36, %43 : vector<8x512xf32>
    %45 = arith.mulf %44, %44 : vector<8x512xf32>
    %cst_36 = arith.constant dense<0.000000e+00> : vector<8xf32>
    %46 = vector.multi_reduction <add>, %45, %cst_36 [1] : vector<8x512xf32> to vector<8xf32>
    %47 = vector.shape_cast %46 : vector<8xf32> to vector<8x1xf32>
    %cst_37 = arith.constant 0.001953125 : f32
    %48 = vector.broadcast %cst_37 : f32 to vector<8x1xf32>
    %49 = arith.mulf %47, %48 : vector<8x1xf32>
    %cst_38 = arith.constant 9.99999974E-6 : f32
    %50 = vector.broadcast %cst_38 : f32 to vector<8x1xf32>
    %51 = arith.addf %49, %50 : vector<8x1xf32>
    %52 = math.rsqrt %51 : vector<8x1xf32>
    %53 = arith.mulf %37, %52 : vector<8x1xf32>
    %54 = vector.broadcast %53 : vector<8x1xf32> to vector<8x512xf32>
    %55 = arith.mulf %44, %54 : vector<8x512xf32>
    %56 = vector.broadcast %38 : vector<8x1xf32> to vector<8x512xf32>
    %57 = arith.addf %55, %56 : vector<8x512xf32>
    %cst_39 = arith.constant 0.000000e+00 : f32
    %58 = vector.broadcast %cst_39 : f32 to vector<8x512xf32>
    %59 = arith.maximumf %57, %58 : vector<8x512xf32>
    %c17_i32_40 = arith.constant 17 : i32
    %60 = tpu.dynamic_rotate %59 by %c17_i32_40 dim 1 : vector<8x512xf32>, i32 -> vector<8x512xf32>
    %c0_41 = arith.constant 0 : index
    %c0_42 = arith.constant 0 : index
    %61 = vector.load %arg4[%c0_41, %c0_42] : memref<72x512xf32, #tpu.memory_space<vmem>>, vector<8x512xf32>
    %62 = arith.mulf %60, %61 : vector<8x512xf32>
    %c0_43 = arith.constant 0 : index
    %c0_44 = arith.constant 0 : index
    %63 = vector.load %arg6[%c0_43, %c0_44] : memref<72x512xf32, #tpu.memory_space<vmem>>, vector<8x512xf32>
    tpu.vector_store %arg6[%c0_43, %c0_44], %62 {strides = array<i32>} : memref<72x512xf32, #tpu.memory_space<vmem>>, vector<8x512xf32>,
    %c16_i32_45 = arith.constant 16 : i32
    %64 = tpu.dynamic_rotate %59 by %c16_i32_45 dim 1 : vector<8x512xf32>, i32 -> vector<8x512xf32>
    %c8_46 = arith.constant 8 : index
    %c0_47 = arith.constant 0 : index
    %65 = vector.load %arg4[%c8_46, %c0_47] : memref<72x512xf32, #tpu.memory_space<vmem>>, vector<8x512xf32>
    %66 = arith.mulf %64, %65 : vector<8x512xf32>
    %c8_48 = arith.constant 8 : index
    %c0_49 = arith.constant 0 : index
    %67 = vector.load %arg6[%c8_48, %c0_49] : memref<72x512xf32, #tpu.memory_space<vmem>>, vector<8x512xf32>
    tpu.vector_store %arg6[%c8_48, %c0_49], %66 {strides = array<i32>} : memref<72x512xf32, #tpu.memory_space<vmem>>, vector<8x512xf32>,
    %c15_i32_50 = arith.constant 15 : i32
    %68 = tpu.dynamic_rotate %59 by %c15_i32_50 dim 1 : vector<8x512xf32>, i32 -> vector<8x512xf32>
    %c16_51 = arith.constant 16 : index
    %c0_52 = arith.constant 0 : index
    %69 = vector.load %arg4[%c16_51, %c0_52] : memref<72x512xf32, #tpu.memory_space<vmem>>, vector<8x512xf32>
    %70 = arith.mulf %68, %69 : vector<8x512xf32>
    %c16_53 = arith.constant 16 : index
    %c0_54 = arith.constant 0 : index
    %71 = vector.load %arg6[%c16_53, %c0_54] : memref<72x512xf32, #tpu.memory_space<vmem>>, vector<8x512xf32>
    tpu.vector_store %arg6[%c16_53, %c0_54], %70 {strides = array<i32>} : memref<72x512xf32, #tpu.memory_space<vmem>>, vector<8x512xf32>,
    %c1_i32_55 = arith.constant 1 : i32
    %72 = tpu.dynamic_rotate %59 by %c1_i32_55 dim 1 : vector<8x512xf32>, i32 -> vector<8x512xf32>
    %c24_56 = arith.constant 24 : index
    %c0_57 = arith.constant 0 : index
    %73 = vector.load %arg4[%c24_56, %c0_57] : memref<72x512xf32, #tpu.memory_space<vmem>>, vector<8x512xf32>
    %74 = arith.mulf %72, %73 : vector<8x512xf32>
    %c24_58 = arith.constant 24 : index
    %c0_59 = arith.constant 0 : index
    %75 = vector.load %arg6[%c24_58, %c0_59] : memref<72x512xf32, #tpu.memory_space<vmem>>, vector<8x512xf32>
    tpu.vector_store %arg6[%c24_58, %c0_59], %74 {strides = array<i32>} : memref<72x512xf32, #tpu.memory_space<vmem>>, vector<8x512xf32>,
    %c32_60 = arith.constant 32 : index
    %c0_61 = arith.constant 0 : index
    %76 = vector.load %arg6[%c32_60, %c0_61] : memref<72x512xf32, #tpu.memory_space<vmem>>, vector<8x512xf32>
    tpu.vector_store %arg6[%c32_60, %c0_61], %59 {strides = array<i32>} : memref<72x512xf32, #tpu.memory_space<vmem>>, vector<8x512xf32>,
    %c511_i32_62 = arith.constant 511 : i32
    %77 = tpu.dynamic_rotate %59 by %c511_i32_62 dim 1 : vector<8x512xf32>, i32 -> vector<8x512xf32>
    %c40_63 = arith.constant 40 : index
    %c0_64 = arith.constant 0 : index
    %78 = vector.load %arg4[%c40_63, %c0_64] : memref<72x512xf32, #tpu.memory_space<vmem>>, vector<8x512xf32>
    %79 = arith.mulf %77, %78 : vector<8x512xf32>
    %c40_65 = arith.constant 40 : index
    %c0_66 = arith.constant 0 : index
    %80 = vector.load %arg6[%c40_65, %c0_66] : memref<72x512xf32, #tpu.memory_space<vmem>>, vector<8x512xf32>
    tpu.vector_store %arg6[%c40_65, %c0_66], %79 {strides = array<i32>} : memref<72x512xf32, #tpu.memory_space<vmem>>, vector<8x512xf32>,
    %c497_i32_67 = arith.constant 497 : i32
    %81 = tpu.dynamic_rotate %59 by %c497_i32_67 dim 1 : vector<8x512xf32>, i32 -> vector<8x512xf32>
    %c48_68 = arith.constant 48 : index
    %c0_69 = arith.constant 0 : index
    %82 = vector.load %arg4[%c48_68, %c0_69] : memref<72x512xf32, #tpu.memory_space<vmem>>, vector<8x512xf32>
    %83 = arith.mulf %81, %82 : vector<8x512xf32>
    %c48_70 = arith.constant 48 : index
    %c0_71 = arith.constant 0 : index
    %84 = vector.load %arg6[%c48_70, %c0_71] : memref<72x512xf32, #tpu.memory_space<vmem>>, vector<8x512xf32>
    tpu.vector_store %arg6[%c48_70, %c0_71], %83 {strides = array<i32>} : memref<72x512xf32, #tpu.memory_space<vmem>>, vector<8x512xf32>,
    %c496_i32_72 = arith.constant 496 : i32
    %85 = tpu.dynamic_rotate %59 by %c496_i32_72 dim 1 : vector<8x512xf32>, i32 -> vector<8x512xf32>
    %c56_73 = arith.constant 56 : index
    %c0_74 = arith.constant 0 : index
    %86 = vector.load %arg4[%c56_73, %c0_74] : memref<72x512xf32, #tpu.memory_space<vmem>>, vector<8x512xf32>
    %87 = arith.mulf %85, %86 : vector<8x512xf32>
    %c56_75 = arith.constant 56 : index
    %c0_76 = arith.constant 0 : index
    %88 = vector.load %arg6[%c56_75, %c0_76] : memref<72x512xf32, #tpu.memory_space<vmem>>, vector<8x512xf32>
    tpu.vector_store %arg6[%c56_75, %c0_76], %87 {strides = array<i32>} : memref<72x512xf32, #tpu.memory_space<vmem>>, vector<8x512xf32>,
    %c495_i32_77 = arith.constant 495 : i32
    %89 = tpu.dynamic_rotate %59 by %c495_i32_77 dim 1 : vector<8x512xf32>, i32 -> vector<8x512xf32>
    %c64_78 = arith.constant 64 : index
    %c0_79 = arith.constant 0 : index
    %90 = vector.load %arg4[%c64_78, %c0_79] : memref<72x512xf32, #tpu.memory_space<vmem>>, vector<8x512xf32>
    %91 = arith.mulf %89, %90 : vector<8x512xf32>
    %c64_80 = arith.constant 64 : index
    %c0_81 = arith.constant 0 : index
    %92 = vector.load %arg6[%c64_80, %c0_81] : memref<72x512xf32, #tpu.memory_space<vmem>>, vector<8x512xf32>
    tpu.vector_store %arg6[%c64_80, %c0_81], %91 {strides = array<i32>} : memref<72x512xf32, #tpu.memory_space<vmem>>, vector<8x512xf32>,
    %c0_82 = arith.constant 0 : index
    %c0_83 = arith.constant 0 : index
    %93 = vector.load %arg2[%c0_82, %c0_83] : memref<8x72xf32, #tpu.memory_space<vmem>>, vector<8x72xf32>
    %c0_84 = arith.constant 0 : index
    %c0_85 = arith.constant 0 : index
    %94 = vector.load %arg6[%c0_84, %c0_85] : memref<72x512xf32, #tpu.memory_space<vmem>>, vector<72x512xf32>
    %cst_86 = arith.constant dense<0.000000e+00> : vector<8x512xf32>
    %95 = tpu.matmul %93, %94, %cst_86 {dimension_numbers = #tpu.dot_dimension_numbers<[1], [0], [0], [1], [0, 0, 1, 1], [], []>} : vector<8x72xf32>, vector<72x512xf32>, vector<8x512xf32> -> vector<8x512xf32>
    %c0_87 = arith.constant 0 : index
    %c2 = arith.constant 2 : index
    %96 = vector.load %arg3[%c0_87, %c2] : memref<8x4xf32, #tpu.memory_space<vmem>>, vector<8x1xf32>
    %c0_88 = arith.constant 0 : index
    %c3 = arith.constant 3 : index
    %97 = vector.load %arg3[%c0_88, %c3] : memref<8x4xf32, #tpu.memory_space<vmem>>, vector<8x1xf32>
    %cst_89 = arith.constant dense<0.000000e+00> : vector<8xf32>
    %98 = vector.multi_reduction <add>, %95, %cst_89 [1] : vector<8x512xf32> to vector<8xf32>
    %99 = vector.shape_cast %98 : vector<8xf32> to vector<8x1xf32>
    %cst_90 = arith.constant 0.001953125 : f32
    %100 = vector.broadcast %cst_90 : f32 to vector<8x1xf32>
    %101 = arith.mulf %99, %100 : vector<8x1xf32>
    %102 = vector.broadcast %101 : vector<8x1xf32> to vector<8x512xf32>
    %103 = arith.subf %95, %102 : vector<8x512xf32>
    %104 = arith.mulf %103, %103 : vector<8x512xf32>
    %cst_91 = arith.constant dense<0.000000e+00> : vector<8xf32>
    %105 = vector.multi_reduction <add>, %104, %cst_91 [1] : vector<8x512xf32> to vector<8xf32>
    %106 = vector.shape_cast %105 : vector<8xf32> to vector<8x1xf32>
    %cst_92 = arith.constant 0.001953125 : f32
    %107 = vector.broadcast %cst_92 : f32 to vector<8x1xf32>
    %108 = arith.mulf %106, %107 : vector<8x1xf32>
    %cst_93 = arith.constant 9.99999974E-6 : f32
    %109 = vector.broadcast %cst_93 : f32 to vector<8x1xf32>
    %110 = arith.addf %108, %109 : vector<8x1xf32>
    %111 = math.rsqrt %110 : vector<8x1xf32>
    %112 = arith.mulf %96, %111 : vector<8x1xf32>
    %113 = vector.broadcast %112 : vector<8x1xf32> to vector<8x512xf32>
    %114 = arith.mulf %103, %113 : vector<8x512xf32>
    %115 = vector.broadcast %97 : vector<8x1xf32> to vector<8x512xf32>
    %116 = arith.addf %114, %115 : vector<8x512xf32>
    %cst_94 = arith.constant 0.000000e+00 : f32
    %117 = vector.broadcast %cst_94 : f32 to vector<8x512xf32>
    %118 = arith.maximumf %116, %117 : vector<8x512xf32>
    %c0_95 = arith.constant 0 : index
    %c0_96 = arith.constant 0 : index
    %119 = vector.load %arg5[%c0_95, %c0_96] : memref<8x512xf32, #tpu.memory_space<vmem>>, vector<8x512xf32>
    tpu.vector_store %arg5[%c0_95, %c0_96], %118 {strides = array<i32>} : memref<8x512xf32, #tpu.memory_space<vmem>>, vector<8x512xf32>,
    return
  }
}

</mosaic_0001>

<llo_original>
// kernel: double_conv.1
$region0: #{double_conv.1}
  #allocation0 [shape = 'u32[]', space=smem, size = 0x4, offset = 0x4, fixed_abs, tag = 'smem constant byte address 0x4 - core index']
  #allocation1 [shape = 'u32[144,128]{1,0:T(1,128)}', space=vmem, size = 0x12000, scoped, tag = 'internal scratch']
  #allocation2 [shape = 'f32[72,512]{1,0:T(8,128)}', space=vmem, size = 0x24000, scoped, tag = 'scratch operand']
  %s0 = inlined_call_operand.vmem [shape: f32[8,512], index: 0, kind: input, shape index: {}]
  %s1 = inlined_call_operand.vmem [shape: f32[8,72], index: 1, kind: input, shape index: {}]
  %s2 = inlined_call_operand.vmem [shape: f32[8,72], index: 2, kind: input, shape index: {}]
  %s3 = inlined_call_operand.vmem [shape: f32[8,4], index: 3, kind: input, shape index: {}]
  %s4 = inlined_call_operand.vmem [shape: f32[72,512], index: 4, kind: input, shape index: {}]
  %s5 = inlined_call_operand.vmem [shape: f32[8,512], index: 5, kind: output, shape index: {}]
  %s6 = sld [smem:[#allocation0]]
  $region30: #{double_conv.1} parent=0
    _
  %s8 = ssub.s32 1, %s6
  %s9 = scalar_select 0, %s8, %s6
  // Predicated region
  $region2: #{double_conv.1} parent=0 // pred_check
    _
  $region3: #{double_conv.1} parent=0 // pred_check_branch
    %11 = sbr.rel (0) target = $region5
  $region4: #{double_conv.1} parent=0 // pred_region
    _
  $region5: #{double_conv.1} parent=0 // pred_fallthru
    _
  // Predicated region
  $region6: #{double_conv.1} parent=0 // pred_check
    _
  $region7: #{double_conv.1} parent=0 // pred_check_branch
    %13 = sbr.rel (0) target = $region9
  $region8: #{double_conv.1} parent=0 // pred_region
    _
  $region9: #{double_conv.1} parent=0 // pred_fallthru
    _
  // Predicated region
  $region10: #{double_conv.1} parent=0 // pred_check
    _
  $region11: #{double_conv.1} parent=0 // pred_check_branch
    %15 = sbr.rel (0) target = $region13
  $region12: #{double_conv.1} parent=0 // pred_region
    _
  $region13: #{double_conv.1} parent=0 // pred_fallthru
    _
  // Predicated region
  $region14: #{double_conv.1} parent=0 // pred_check
    _
  $region15: #{double_conv.1} parent=0 // pred_check_branch
    %17 = sbr.rel (0) target = $region17
  $region16: #{double_conv.1} parent=0 // pred_region
    _
  $region17: #{double_conv.1} parent=0 // pred_fallthru
    _
  // Predicated region
  $region18: #{double_conv.1} parent=0 // pred_check
    _
  $region19: #{double_conv.1} parent=0 // pred_check_branch
    %19 = sbr.rel (0) target = $region21
  $region20: #{double_conv.1} parent=0 // pred_region
    _
  $region21: #{double_conv.1} parent=0 // pred_fallthru
    _
  %v20 = vld [vmem:[%s0] sm:$0xff]
  %v21 = vld [vmem:[%s0 + $0x8] sm:$0xff]
  %v22 = vld [vmem:[%s0 + $0x10] sm:$0xff]
  %v23 = vld [vmem:[%s0 + $0x18] sm:$0xff]
  %24 = vrot.lane.b32.xlu0 %v20, 17
  %v25 = vpop.permute.xlu0 %24
  %26 = vrot.lane.b32.xlu0 %v21, 17
  %v27 = vpop.permute.xlu0 %26
  %28 = vrot.lane.b32.xlu0 %v22, 17
  %v29 = vpop.permute.xlu0 %28
  %30 = vrot.lane.b32.xlu0 %v23, 17
  %v31 = vpop.permute.xlu0 %30
  %v32 = vlaneseq
  %v33 = vand.u32 %v32, 127
  %vm34 = vcmp.lt.s32.totalorder %v33, 17
  %v35 = vsel %vm34, %v29, %v31
  %v36 = vsel %vm34, %v27, %v29
  %v37 = vsel %vm34, %v25, %v27
  %v38 = vsel %vm34, %v31, %v25
  %v39 = vld [vmem:[%s4] sm:$0xff]
  %v40 = vld [vmem:[%s4 + $0x8] sm:$0xff]
  %v41 = vld [vmem:[%s4 + $0x10] sm:$0xff]
  %v42 = vld [vmem:[%s4 + $0x18] sm:$0xff]
  %v43 = vmul.f32 %v38, %v39
  %v44 = vmul.f32 %v37, %v40
  %v45 = vmul.f32 %v36, %v41
  %v46 = vmul.f32 %v35, %v42
  %47 = vst [vmem:[#allocation2] sm:$0xff] %v43
  %48 = vst [vmem:[#allocation2 + $0x8] sm:$0xff] %v44
  %49 = vst [vmem:[#allocation2 + $0x10] sm:$0xff] %v45
  %50 = vst [vmem:[#allocation2 + $0x18] sm:$0xff] %v46
  %51 = vrot.lane.b32.xlu0 %v20, 16
  %v52 = vpop.permute.xlu0 %51
  %53 = vrot.lane.b32.xlu0 %v21, 16
  %v54 = vpop.permute.xlu0 %53
  %55 = vrot.lane.b32.xlu0 %v22, 16
  %v56 = vpop.permute.xlu0 %55
  %57 = vrot.lane.b32.xlu0 %v23, 16
  %v58 = vpop.permute.xlu0 %57
  %vm59 = vcmp.lt.s32.totalorder %v33, 16
  %v60 = vsel %vm59, %v56, %v58
  %v61 = vsel %vm59, %v54, %v56
  %v62 = vsel %vm59, %v52, %v54
  %v63 = vsel %vm59, %v58, %v52
  %v64 = vld [vmem:[%s4 + $0x20] sm:$0xff]
  %v65 = vld [vmem:[%s4 + $0x28] sm:$0xff]
  %v66 = vld [vmem:[%s4 + $0x30] sm:$0xff]
  %v67 = vld [vmem:[%s4 + $0x38] sm:$0xff]
  %v68 = vmul.f32 %v63, %v64
  %v69 = vmul.f32 %v62, %v65
  %v70 = vmul.f32 %v61, %v66
  %v71 = vmul.f32 %v60, %v67
  %72 = vst [vmem:[#allocation2 + $0x20] sm:$0xff] %v68
  %73 = vst [vmem:[#allocation2 + $0x28] sm:$0xff] %v69
  %74 = vst [vmem:[#allocation2 + $0x30] sm:$0xff] %v70
  %75 = vst [vmem:[#allocation2 + $0x38] sm:$0xff] %v71
  %76 = vrot.lane.b32.xlu0 %v20, 15
  %v77 = vpop.permute.xlu0 %76
  %78 = vrot.lane.b32.xlu0 %v21, 15
  %v79 = vpop.permute.xlu0 %78
  %80 = vrot.lane.b32.xlu0 %v22, 15
  %v81 = vpop.permute.xlu0 %80
  %82 = vrot.lane.b32.xlu0 %v23, 15
  %v83 = vpop.permute.xlu0 %82
  %vm84 = vcmp.lt.s32.totalorder %v33, 15
  %v85 = vsel %vm84, %v81, %v83
  %v86 = vsel %vm84, %v79, %v81
  %v87 = vsel %vm84, %v77, %v79
  %v88 = vsel %vm84, %v83, %v77
  %v89 = vld [vmem:[%s4 + $0x40] sm:$0xff]
  %v90 = vld [vmem:[%s4 + $0x48] sm:$0xff]
  %v91 = vld [vmem:[%s4 + $0x50] sm:$0xff]
  %v92 = vld [vmem:[%s4 + $0x58] sm:$0xff]
  %v93 = vmul.f32 %v88, %v89
  %v94 = vmul.f32 %v87, %v90
  %v95 = vmul.f32 %v86, %v91
  %v96 = vmul.f32 %v85, %v92
  %97 = vst [vmem:[#allocation2 + $0x40] sm:$0xff] %v93
  %98 = vst [vmem:[#allocation2 + $0x48] sm:$0xff] %v94
  %99 = vst [vmem:[#allocation2 + $0x50] sm:$0xff] %v95
  %100 = vst [vmem:[#allocation2 + $0x58] sm:$0xff] %v96
  %101 = vrot.lane.b32.xlu0 %v20, 1
  %v102 = vpop.permute.xlu0 %101
  %103 = vrot.lane.b32.xlu0 %v21, 1
  %v104 = vpop.permute.xlu0 %103
  %105 = vrot.lane.b32.xlu0 %v22, 1
  %v106 = vpop.permute.xlu0 %105
  %107 = vrot.lane.b32.xlu0 %v23, 1
  %v108 = vpop.permute.xlu0 %107
  %vm109 = vcmp.lt.s32.totalorder %v33, 1
  %v110 = vsel %vm109, %v106, %v108
  %v111 = vsel %vm109, %v104, %v106
  %v112 = vsel %vm109, %v102, %v104
  %v113 = vsel %vm109, %v108, %v102
  %v114 = vld [vmem:[%s4 + $0x60] sm:$0xff]
  %v115 = vld [vmem:[%s4 + $0x68] sm:$0xff]
  %v116 = vld [vmem:[%s4 + $0x70] sm:$0xff]
  %v117 = vld [vmem:[%s4 + $0x78] sm:$0xff]
  %v118 = vmul.f32 %v113, %v114
  %v119 = vmul.f32 %v112, %v115
  %v120 = vmul.f32 %v111, %v116
  %v121 = vmul.f32 %v110, %v117
  %122 = vst [vmem:[#allocation2 + $0x60] sm:$0xff] %v118
  %123 = vst [vmem:[#allocation2 + $0x68] sm:$0xff] %v119
  %124 = vst [vmem:[#allocation2 + $0x70] sm:$0xff] %v120
  %125 = vst [vmem:[#allocation2 + $0x78] sm:$0xff] %v121
  %126 = vst [vmem:[#allocation2 + $0x80] sm:$0xff] %v20
  %127 = vst [vmem:[#allocation2 + $0x88] sm:$0xff] %v21
  %128 = vst [vmem:[#allocation2 + $0x90] sm:$0xff] %v22
  %129 = vst [vmem:[#allocation2 + $0x98] sm:$0xff] %v23
  %130 = vrot.lane.b32.xlu0 %v20, 127
  %v131 = vpop.permute.xlu0 %130
  %132 = vrot.lane.b32.xlu0 %v21, 127
  %v133 = vpop.permute.xlu0 %132
  %134 = vrot.lane.b32.xlu0 %v22, 127
  %v135 = vpop.permute.xlu0 %134
  %136 = vrot.lane.b32.xlu0 %v23, 127
  %v137 = vpop.permute.xlu0 %136
  %vm138 = vcmp.lt.s32.totalorder %v33, 127
  %v139 = vsel %vm138, %v135, %v137
  %v140 = vsel %vm138, %v133, %v135
  %v141 = vsel %vm138, %v131, %v133
  %v142 = vsel %vm138, %v137, %v131
  %v143 = vld [vmem:[%s4 + $0xa0] sm:$0xff]
  %v144 = vld [vmem:[%s4 + $0xa8] sm:$0xff]
  %v145 = vld [vmem:[%s4 + $0xb0] sm:$0xff]
  %v146 = vld [vmem:[%s4 + $0xb8] sm:$0xff]
  %v147 = vmul.f32 %v141, %v143
  %v148 = vmul.f32 %v140, %v144
  %v149 = vmul.f32 %v139, %v145
  %v150 = vmul.f32 %v142, %v146
  %151 = vst [vmem:[#allocation2 + $0xa0] sm:$0xff] %v147
  %152 = vst [vmem:[#allocation2 + $0xa8] sm:$0xff] %v148
  %153 = vst [vmem:[#allocation2 + $0xb0] sm:$0xff] %v149
  %154 = vst [vmem:[#allocation2 + $0xb8] sm:$0xff] %v150
  %155 = vrot.lane.b32.xlu0 %v20, 113
  %v156 = vpop.permute.xlu0 %155
  %157 = vrot.lane.b32.xlu0 %v21, 113
  %v158 = vpop.permute.xlu0 %157
  %159 = vrot.lane.b32.xlu0 %v22, 113
  %v160 = vpop.permute.xlu0 %159
  %161 = vrot.lane.b32.xlu0 %v23, 113
  %v162 = vpop.permute.xlu0 %161
  %vm163 = vcmp.lt.s32.totalorder %v33, 113
  %v164 = vsel %vm163, %v160, %v162
  %v165 = vsel %vm163, %v158, %v160
  %v166 = vsel %vm163, %v156, %v158
  %v167 = vsel %vm163, %v162, %v156
  %v168 = vld [vmem:[%s4 + $0xc0] sm:$0xff]
  %v169 = vld [vmem:[%s4 + $0xc8] sm:$0xff]
  %v170 = vld [vmem:[%s4 + $0xd0] sm:$0xff]
  %v171 = vld [vmem:[%s4 + $0xd8] sm:$0xff]
  %v172 = vmul.f32 %v166, %v168
  %v173 = vmul.f32 %v165, %v169
  %v174 = vmul.f32 %v164, %v170
  %v175 = vmul.f32 %v167, %v171
  %176 = vst [vmem:[#allocation2 + $0xc0] sm:$0xff] %v172
  %177 = vst [vmem:[#allocation2 + $0xc8] sm:$0xff] %v173
  %178 = vst [vmem:[#allocation2 + $0xd0] sm:$0xff] %v174
  %179 = vst [vmem:[#allocation2 + $0xd8] sm:$0xff] %v175
  %180 = vrot.lane.b32.xlu0 %v20, 112
  %v181 = vpop.permute.xlu0 %180
  %182 = vrot.lane.b32.xlu0 %v21, 112
  %v183 = vpop.permute.xlu0 %182
  %184 = vrot.lane.b32.xlu0 %v22, 112
  %v185 = vpop.permute.xlu0 %184
  %186 = vrot.lane.b32.xlu0 %v23, 112
  %v187 = vpop.permute.xlu0 %186
  %vm188 = vcmp.lt.s32.totalorder %v33, 112
  %v189 = vsel %vm188, %v185, %v187
  %v190 = vsel %vm188, %v183, %v185
  %v191 = vsel %vm188, %v181, %v183
  %v192 = vsel %vm188, %v187, %v181
  %v193 = vld [vmem:[%s4 + $0xe0] sm:$0xff]
  %v194 = vld [vmem:[%s4 + $0xe8] sm:$0xff]
  %v195 = vld [vmem:[%s4 + $0xf0] sm:$0xff]
  %v196 = vld [vmem:[%s4 + $0xf8] sm:$0xff]
  %v197 = vmul.f32 %v191, %v193
  %v198 = vmul.f32 %v190, %v194
  %v199 = vmul.f32 %v189, %v195
  %v200 = vmul.f32 %v192, %v196
  %201 = vst [vmem:[#allocation2 + $0xe0] sm:$0xff] %v197
  %202 = vst [vmem:[#allocation2 + $0xe8] sm:$0xff] %v198
  %203 = vst [vmem:[#allocation2 + $0xf0] sm:$0xff] %v199
  %204 = vst [vmem:[#allocation2 + $0xf8] sm:$0xff] %v200
  %205 = vrot.lane.b32.xlu0 %v20, 111
  %v206 = vpop.permute.xlu0 %205
  %207 = vrot.lane.b32.xlu0 %v21, 111
  %v208 = vpop.permute.xlu0 %207
  %209 = vrot.lane.b32.xlu0 %v22, 111
  %v210 = vpop.permute.xlu0 %209
  %211 = vrot.lane.b32.xlu0 %v23, 111
  %v212 = vpop.permute.xlu0 %211
  %vm213 = vcmp.lt.s32.totalorder %v33, 111
  %v214 = vsel %vm213, %v210, %v212
  %v215 = vsel %vm213, %v208, %v210
  %v216 = vsel %vm213, %v206, %v208
  %v217 = vsel %vm213, %v212, %v206
  %v218 = vld [vmem:[%s4 + $0x100] sm:$0xff]
  %v219 = vld [vmem:[%s4 + $0x108] sm:$0xff]
  %v220 = vld [vmem:[%s4 + $0x110] sm:$0xff]
  %v221 = vld [vmem:[%s4 + $0x118] sm:$0xff]
  %v222 = vmul.f32 %v216, %v218
  %v223 = vmul.f32 %v215, %v219
  %v224 = vmul.f32 %v214, %v220
  %v225 = vmul.f32 %v217, %v221
  %226 = vst [vmem:[#allocation2 + $0x100] sm:$0xff] %v222
  %227 = vst [vmem:[#allocation2 + $0x108] sm:$0xff] %v223
  %228 = vst [vmem:[#allocation2 + $0x110] sm:$0xff] %v224
  %229 = vst [vmem:[#allocation2 + $0x118] sm:$0xff] %v225
  %v230 = vld [vmem:[%s1] sm:$0xff]
  %v231 = vld [vmem:[#allocation2] sm:$0xff]
  %v232 = vld [vmem:[#allocation2 + $0x8] sm:$0xff]
  %v233 = vld [vmem:[#allocation2 + $0x10] sm:$0xff]
  %v234 = vld [vmem:[#allocation2 + $0x18] sm:$0xff]
  %v235 = vld [vmem:[#allocation2 + $0x20] sm:$0xff]
  %v236 = vld [vmem:[#allocation2 + $0x28] sm:$0xff]
  %v237 = vld [vmem:[#allocation2 + $0x30] sm:$0xff]
  %v238 = vld [vmem:[#allocation2 + $0x38] sm:$0xff]
  %v239 = vld [vmem:[#allocation2 + $0x40] sm:$0xff]
  %v240 = vld [vmem:[#allocation2 + $0x48] sm:$0xff]
  %v241 = vld [vmem:[#allocation2 + $0x50] sm:$0xff]
  %v242 = vld [vmem:[#allocation2 + $0x58] sm:$0xff]
  %v243 = vld [vmem:[#allocation2 + $0x60] sm:$0xff]
  %v244 = vld [vmem:[#allocation2 + $0x68] sm:$0xff]
  %v245 = vld [vmem:[#allocation2 + $0x70] sm:$0xff]
  %v246 = vld [vmem:[#allocation2 + $0x78] sm:$0xff]
  %v247 = vld [vmem:[#allocation2 + $0x80] sm:$0xff]
  %v248 = vld [vmem:[#allocation2 + $0x88] sm:$0xff]
  %v249 = vld [vmem:[#allocation2 + $0x90] sm:$0xff]
  %v250 = vld [vmem:[#allocation2 + $0x98] sm:$0xff]
  %v251 = vld [vmem:[#allocation2 + $0xa0] sm:$0xff]
  %v252 = vld [vmem:[#allocation2 + $0xa8] sm:$0xff]
  %v253 = vld [vmem:[#allocation2 + $0xb0] sm:$0xff]
  %v254 = vld [vmem:[#allocation2 + $0xb8] sm:$0xff]
  %v255 = vld [vmem:[#allocation2 + $0xc0] sm:$0xff]
  %v256 = vld [vmem:[#allocation2 + $0xc8] sm:$0xff]
  %v257 = vld [vmem:[#allocation2 + $0xd0] sm:$0xff]
  %v258 = vld [vmem:[#allocation2 + $0xd8] sm:$0xff]
  %v259 = vld [vmem:[#allocation2 + $0xe0] sm:$0xff]
  %v260 = vld [vmem:[#allocation2 + $0xe8] sm:$0xff]
  %v261 = vld [vmem:[#allocation2 + $0xf0] sm:$0xff]
  %v262 = vld [vmem:[#allocation2 + $0xf8] sm:$0xff]
  %v263 = vld [vmem:[#allocation2 + $0x100] sm:$0xff]
  %v264 = vld [vmem:[#allocation2 + $0x108] sm:$0xff]
  %v265 = vld [vmem:[#allocation2 + $0x110] sm:$0xff]
  %v266 = vld [vmem:[#allocation2 + $0x118] sm:$0xff]
  %vm267 = vcmask 588800
  %v269 = vsel %vm267, %v230, 0
  %271 = vmatprep.subr.mxu0 %v232
  %272 = vmatpush1.msra.mxu0 %v231
  %273 = vmatprep.subr.mxu0 %v236
  %274 = vmatpush1.msra.mxu0 %v235
  %275 = vmatprep.subr.mxu0 %v240
  %276 = vmatpush1.msra.mxu0 %v239
  %277 = vmatprep.subr.mxu0 %v244
  %278 = vmatpush1.msra.mxu0 %v243
  %279 = vmatprep.subr.mxu0 %v248
  %280 = vmatpush1.msra.mxu0 %v247
  %281 = vmatprep.subr.mxu0 %v252
  %282 = vmatpush1.msra.mxu0 %v251
  %283 = vmatprep.subr.mxu0 %v256
  %284 = vmatpush1.msra.mxu0 %v255
  %285 = vmatprep.subr.mxu0 %v260
  %286 = vmatpush1.msra.mxu0 %v259
  %287 = vmatprep.subr.mxu0 %v264
  %288 = vmatpush1.msra.mxu0 %v263
  %289 = vmatprep.subr.mxu0 0.0
  %290 = vmatpush1.msra.mxu0 0.0
  %291 = vmatprep.subr.mxu0 0.0
  %292 = vmatpush1.msra.mxu0 0.0
  %293 = vmatprep.subr.mxu0 0.0
  %294 = vmatpush1.msra.mxu0 0.0
  %295 = vmatprep.subr.mxu0 0.0
  %296 = vmatpush1.msra.mxu0 0.0
  %297 = vmatprep.subr.mxu0 0.0
  %298 = vmatpush1.msra.mxu0 0.0
  %299 = vmatprep.subr.mxu0 0.0
  %300 = vmatpush1.msra.mxu0 0.0
  %301 = vmatprep.subr.mxu0 0.0
  %302 = vmatpush1.msra.mxu0 0.0
  %303 = vmatprep.subr.mxu0 0.0
  %304 = vmatpush1.msra.mxu0 0.0
  %305 = vmatprep.subr.mxu0 0.0
  %306 = vmatpush1.msra.mxu0 0.0
  %307 = vmatprep.subr.mxu0 0.0
  %308 = vmatpush1.msra.mxu0 0.0
  %309 = vmatprep.subr.mxu0 0.0
  %310 = vmatpush1.msra.mxu0 0.0
  %311 = vmatprep.subr.mxu0 0.0
  %312 = vmatpush1.msra.mxu0 0.0
  %313 = vmatprep.subr.mxu0 0.0
  %314 = vmatpush1.msra.mxu0 0.0
  %315 = vmatprep.subr.mxu0 0.0
  %316 = vmatpush1.msra.mxu0 0.0
  %317 = vmatprep.subr.mxu0 0.0
  %318 = vmatpush1.msra.mxu0 0.0
  %319 = vmatprep.subr.mxu0 0.0
  %320 = vmatpush1.msra.mxu0 0.0
  %321 = vmatprep.subr.mxu0 0.0
  %322 = vmatpush1.msra.mxu0 0.0
  %323 = vmatprep.subr.mxu0 0.0
  %324 = vmatpush1.msra.mxu0 0.0
  %325 = vmatprep.subr.mxu0 0.0
  %326 = vmatpush1.msra.mxu0 0.0
  %327 = vmatprep.subr.mxu0 0.0
  %328 = vmatpush1.msra.mxu0 0.0
  %329 = vmatprep.subr.mxu0 0.0
  %330 = vmatpush1.msra.mxu0 0.0
  %331 = vmatprep.subr.mxu0 0.0
  %332 = vmatpush1.msra.mxu0 0.0
  %333 = vmatprep.subr.mxu0 0.0
  %334 = vmatpush1.msra.mxu0 0.0
  %335 = vmatprep.mubr.f32.mxu0 0.0
  %336 = vmatmul.mubr.f32.gmra.mrb[0].mxu0 %v269
  %v337 = vpop.f32.mrb[0].mxu0
  %v338 = vadd.f32 0.0, %v337
  %v339 = vpop.f32.mrb[0].mxu0
  %v340 = vadd.f32 0.0, %v339
  %341 = vdwg.mxu0
  %342 = vmatprep.subr.mxu0 %v234
  %343 = vmatpush1.msra.mxu0 %v233
  %344 = vmatprep.subr.mxu0 %v238
  %345 = vmatpush1.msra.mxu0 %v237
  %346 = vmatprep.subr.mxu0 %v242
  %347 = vmatpush1.msra.mxu0 %v241
  %348 = vmatprep.subr.mxu0 %v246
  %349 = vmatpush1.msra.mxu0 %v245
  %350 = vmatprep.subr.mxu0 %v250
  %351 = vmatpush1.msra.mxu0 %v249
  %352 = vmatprep.subr.mxu0 %v254
  %353 = vmatpush1.msra.mxu0 %v253
  %354 = vmatprep.subr.mxu0 %v258
  %355 = vmatpush1.msra.mxu0 %v257
  %356 = vmatprep.subr.mxu0 %v262
  %357 = vmatpush1.msra.mxu0 %v261
  %358 = vmatprep.subr.mxu0 %v266
  %359 = vmatpush1.msra.mxu0 %v265
  %360 = vmatprep.subr.mxu0 0.0
  %361 = vmatpush1.msra.mxu0 0.0
  %362 = vmatprep.subr.mxu0 0.0
  %363 = vmatpush1.msra.mxu0 0.0
  %364 = vmatprep.subr.mxu0 0.0
  %365 = vmatpush1.msra.mxu0 0.0
  %366 = vmatprep.subr.mxu0 0.0
  %367 = vmatpush1.msra.mxu0 0.0
  %368 = vmatprep.subr.mxu0 0.0
  %369 = vmatpush1.msra.mxu0 0.0
  %370 = vmatprep.subr.mxu0 0.0
  %371 = vmatpush1.msra.mxu0 0.0
  %372 = vmatprep.subr.mxu0 0.0
  %373 = vmatpush1.msra.mxu0 0.0
  %374 = vmatprep.subr.mxu0 0.0
  %375 = vmatpush1.msra.mxu0 0.0
  %376 = vmatprep.subr.mxu0 0.0
  %377 = vmatpush1.msra.mxu0 0.0
  %378 = vmatprep.subr.mxu0 0.0
  %379 = vmatpush1.msra.mxu0 0.0
  %380 = vmatprep.subr.mxu0 0.0
  %381 = vmatpush1.msra.mxu0 0.0
  %382 = vmatprep.subr.mxu0 0.0
  %383 = vmatpush1.msra.mxu0 0.0
  %384 = vmatprep.subr.mxu0 0.0
  %385 = vmatpush1.msra.mxu0 0.0
  %386 = vmatprep.subr.mxu0 0.0
  %387 = vmatpush1.msra.mxu0 0.0
  %388 = vmatprep.subr.mxu0 0.0
  %389 = vmatpush1.msra.mxu0 0.0
  %390 = vmatprep.subr.mxu0 0.0
  %391 = vmatpush1.msra.mxu0 0.0
  %392 = vmatprep.subr.mxu0 0.0
  %393 = vmatpush1.msra.mxu0 0.0
  %394 = vmatprep.subr.mxu0 0.0
  %395 = vmatpush1.msra.mxu0 0.0
  %396 = vmatprep.subr.mxu0 0.0
  %397 = vmatpush1.msra.mxu0 0.0
  %398 = vmatprep.subr.mxu0 0.0
  %399 = vmatpush1.msra.mxu0 0.0
  %400 = vmatprep.subr.mxu0 0.0
  %401 = vmatpush1.msra.mxu0 0.0
  %402 = vmatprep.subr.mxu0 0.0
  %403 = vmatpush1.msra.mxu0 0.0
  %404 = vmatprep.subr.mxu0 0.0
  %405 = vmatpush1.msra.mxu0 0.0
  %406 = vmatprep.mubr.f32.mxu0 0.0
  %407 = vmatmul.mubr.f32.gmra.mrb[0].mxu0 %v269
  %v408 = vpop.f32.mrb[0].mxu0
  %v409 = vadd.f32 0.0, %v408
  %v410 = vpop.f32.mrb[0].mxu0
  %v411 = vadd.f32 0.0, %v410
  %412 = vdwg.mxu0
  %v413 = vld [vmem:[%s3] sm:$0xff]
  %v414 = vadd.f32 %v338, %v340
  %v415 = vadd.f32 %v414, %v409
  %v416 = vadd.f32 %v415, %v411
  %417 = vadd.xlane.f32.xlu0 %v416
  %v418 = vpop.xlane.xlu0 %417
  %v419 = vmul.f32 %v418, 0.001953125
  %v420 = vsub.f32 %v338, %v419
  %v421 = vsub.f32 %v340, %v419
  %v422 = vsub.f32 %v409, %v419
  %v423 = vsub.f32 %v411, %v419
  %v424 = vmul.f32 %v420, %v420
  %v425 = vmul.f32 %v421, %v421
  %v426 = vmul.f32 %v422, %v422
  %v427 = vmul.f32 %v423, %v423
  %v428 = vadd.f32 %v424, %v425
  %v429 = vadd.f32 %v428, %v426
  %v430 = vadd.f32 %v429, %v427
  %431 = vadd.xlane.f32.xlu0 %v430
  %v432 = vpop.xlane.xlu0 %431
  %v433 = vmul.f32 %v432, 0.001953125
  %v434 = vadd.f32 %v433, 1e-05
  %v435 = vrsqrt.pop %v434
  %v436 = vmul.f32 %v413, %v435
  %438 = vset.pattern.permute.xlu0 0
  %439 = vperm.xlu0 %438, %v436
  %v440 = vpop.permute.xlu0 %439
  %v442 = vmul.f32 %v420, %v440
  %v443 = vmul.f32 %v421, %v440
  %v444 = vmul.f32 %v422, %v440
  %v445 = vmul.f32 %v423, %v440
  %447 = vset.pattern.permute.xlu0 1
  %448 = vperm.xlu0 %447, %v413
  %v449 = vpop.permute.xlu0 %448
  %v451 = vadd.f32 %v442, %v449
  %v452 = vadd.f32 %v443, %v449
  %v453 = vadd.f32 %v444, %v449
  %v454 = vadd.f32 %v445, %v449
  %v455 = vmax.f32 %v451, 0.0
  %v456 = vmax.f32 %v452, 0.0
  %v457 = vmax.f32 %v453, 0.0
  %v458 = vmax.f32 %v454, 0.0
  %459 = vrot.lane.b32.xlu0 %v455, 17
  %v460 = vpop.permute.xlu0 %459
  %461 = vrot.lane.b32.xlu0 %v456, 17
  %v462 = vpop.permute.xlu0 %461
  %463 = vrot.lane.b32.xlu0 %v457, 17
  %v464 = vpop.permute.xlu0 %463
  %465 = vrot.lane.b32.xlu0 %v458, 17
  %v466 = vpop.permute.xlu0 %465
  %v467 = vsel %vm34, %v464, %v466
  %v468 = vsel %vm34, %v462, %v464
  %v469 = vsel %vm34, %v460, %v462
  %v470 = vsel %vm34, %v466, %v460
  %v471 = vld [vmem:[%s4] sm:$0xff]
  %v472 = vld [vmem:[%s4 + $0x8] sm:$0xff]
  %v473 = vld [vmem:[%s4 + $0x10] sm:$0xff]
  %v474 = vld [vmem:[%s4 + $0x18] sm:$0xff]
  %v475 = vmul.f32 %v470, %v471
  %v476 = vmul.f32 %v469, %v472
  %v477 = vmul.f32 %v468, %v473
  %v478 = vmul.f32 %v467, %v474
  %479 = vst [vmem:[#allocation2] sm:$0xff] %v475
  %480 = vst [vmem:[#allocation2 + $0x8] sm:$0xff] %v476
  %481 = vst [vmem:[#allocation2 + $0x10] sm:$0xff] %v477
  %482 = vst [vmem:[#allocation2 + $0x18] sm:$0xff] %v478
  %483 = vrot.lane.b32.xlu0 %v455, 16
  %v484 = vpop.permute.xlu0 %483
  %485 = vrot.lane.b32.xlu0 %v456, 16
  %v486 = vpop.permute.xlu0 %485
  %487 = vrot.lane.b32.xlu0 %v457, 16
  %v488 = vpop.permute.xlu0 %487
  %489 = vrot.lane.b32.xlu0 %v458, 16
  %v490 = vpop.permute.xlu0 %489
  %v491 = vsel %vm59, %v488, %v490
  %v492 = vsel %vm59, %v486, %v488
  %v493 = vsel %vm59, %v484, %v486
  %v494 = vsel %vm59, %v490, %v484
  %v495 = vld [vmem:[%s4 + $0x20] sm:$0xff]
  %v496 = vld [vmem:[%s4 + $0x28] sm:$0xff]
  %v497 = vld [vmem:[%s4 + $0x30] sm:$0xff]
  %v498 = vld [vmem:[%s4 + $0x38] sm:$0xff]
  %v499 = vmul.f32 %v494, %v495
  %v500 = vmul.f32 %v493, %v496
  %v501 = vmul.f32 %v492, %v497
  %v502 = vmul.f32 %v491, %v498
  %503 = vst [vmem:[#allocation2 + $0x20] sm:$0xff] %v499
  %504 = vst [vmem:[#allocation2 + $0x28] sm:$0xff] %v500
  %505 = vst [vmem:[#allocation2 + $0x30] sm:$0xff] %v501
  %506 = vst [vmem:[#allocation2 + $0x38] sm:$0xff] %v502
  %507 = vrot.lane.b32.xlu0 %v455, 15
  %v508 = vpop.permute.xlu0 %507
  %509 = vrot.lane.b32.xlu0 %v456, 15
  %v510 = vpop.permute.xlu0 %509
  %511 = vrot.lane.b32.xlu0 %v457, 15
  %v512 = vpop.permute.xlu0 %511
  %513 = vrot.lane.b32.xlu0 %v458, 15
  %v514 = vpop.permute.xlu0 %513
  %v515 = vsel %vm84, %v512, %v514
  %v516 = vsel %vm84, %v510, %v512
  %v517 = vsel %vm84, %v508, %v510
  %v518 = vsel %vm84, %v514, %v508
  %v519 = vld [vmem:[%s4 + $0x40] sm:$0xff]
  %v520 = vld [vmem:[%s4 + $0x48] sm:$0xff]
  %v521 = vld [vmem:[%s4 + $0x50] sm:$0xff]
  %v522 = vld [vmem:[%s4 + $0x58] sm:$0xff]
  %v523 = vmul.f32 %v518, %v519
  %v524 = vmul.f32 %v517, %v520
  %v525 = vmul.f32 %v516, %v521
  %v526 = vmul.f32 %v515, %v522
  %527 = vst [vmem:[#allocation2 + $0x40] sm:$0xff] %v523
  %528 = vst [vmem:[#allocation2 + $0x48] sm:$0xff] %v524
  %529 = vst [vmem:[#allocation2 + $0x50] sm:$0xff] %v525
  %530 = vst [vmem:[#allocation2 + $0x58] sm:$0xff] %v526
  %531 = vrot.lane.b32.xlu0 %v455, 1
  %v532 = vpop.permute.xlu0 %531
  %533 = vrot.lane.b32.xlu0 %v456, 1
  %v534 = vpop.permute.xlu0 %533
  %535 = vrot.lane.b32.xlu0 %v457, 1
  %v536 = vpop.permute.xlu0 %535
  %537 = vrot.lane.b32.xlu0 %v458, 1
  %v538 = vpop.permute.xlu0 %537
  %v539 = vsel %vm109, %v536, %v538
  %v540 = vsel %vm109, %v534, %v536
  %v541 = vsel %vm109, %v532, %v534
  %v542 = vsel %vm109, %v538, %v532
  %v543 = vld [vmem:[%s4 + $0x60] sm:$0xff]
  %v544 = vld [vmem:[%s4 + $0x68] sm:$0xff]
  %v545 = vld [vmem:[%s4 + $0x70] sm:$0xff]
  %v546 = vld [vmem:[%s4 + $0x78] sm:$0xff]
  %v547 = vmul.f32 %v542, %v543
  %v548 = vmul.f32 %v541, %v544
  %v549 = vmul.f32 %v540, %v545
  %v550 = vmul.f32 %v539, %v546
  %551 = vst [vmem:[#allocation2 + $0x60] sm:$0xff] %v547
  %552 = vst [vmem:[#allocation2 + $0x68] sm:$0xff] %v548
  %553 = vst [vmem:[#allocation2 + $0x70] sm:$0xff] %v549
  %554 = vst [vmem:[#allocation2 + $0x78] sm:$0xff] %v550
  %555 = vst [vmem:[#allocation2 + $0x80] sm:$0xff] %v455
  %556 = vst [vmem:[#allocation2 + $0x88] sm:$0xff] %v456
  %557 = vst [vmem:[#allocation2 + $0x90] sm:$0xff] %v457
  %558 = vst [vmem:[#allocation2 + $0x98] sm:$0xff] %v458
  %559 = vrot.lane.b32.xlu0 %v455, 127
  %v560 = vpop.permute.xlu0 %559
  %561 = vrot.lane.b32.xlu0 %v456, 127
  %v562 = vpop.permute.xlu0 %561
  %563 = vrot.lane.b32.xlu0 %v457, 127
  %v564 = vpop.permute.xlu0 %563
  %565 = vrot.lane.b32.xlu0 %v458, 127
  %v566 = vpop.permute.xlu0 %565
  %v567 = vsel %vm138, %v564, %v566
  %v568 = vsel %vm138, %v562, %v564
  %v569 = vsel %vm138, %v560, %v562
  %v570 = vsel %vm138, %v566, %v560
  %v571 = vld [vmem:[%s4 + $0xa0] sm:$0xff]
  %v572 = vld [vmem:[%s4 + $0xa8] sm:$0xff]
  %v573 = vld [vmem:[%s4 + $0xb0] sm:$0xff]
  %v574 = vld [vmem:[%s4 + $0xb8] sm:$0xff]
  %v575 = vmul.f32 %v569, %v571
  %v576 = vmul.f32 %v568, %v572
  %v577 = vmul.f32 %v567, %v573
  %v578 = vmul.f32 %v570, %v574
  %579 = vst [vmem:[#allocation2 + $0xa0] sm:$0xff] %v575
  %580 = vst [vmem:[#allocation2 + $0xa8] sm:$0xff] %v576
  %581 = vst [vmem:[#allocation2 + $0xb0] sm:$0xff] %v577
  %582 = vst [vmem:[#allocation2 + $0xb8] sm:$0xff] %v578
  %583 = vrot.lane.b32.xlu0 %v455, 113
  %v584 = vpop.permute.xlu0 %583
  %585 = vrot.lane.b32.xlu0 %v456, 113
  %v586 = vpop.permute.xlu0 %585
  %587 = vrot.lane.b32.xlu0 %v457, 113
  %v588 = vpop.permute.xlu0 %587
  %589 = vrot.lane.b32.xlu0 %v458, 113
  %v590 = vpop.permute.xlu0 %589
  %v591 = vsel %vm163, %v588, %v590
  %v592 = vsel %vm163, %v586, %v588
  %v593 = vsel %vm163, %v584, %v586
  %v594 = vsel %vm163, %v590, %v584
  %v595 = vld [vmem:[%s4 + $0xc0] sm:$0xff]
  %v596 = vld [vmem:[%s4 + $0xc8] sm:$0xff]
  %v597 = vld [vmem:[%s4 + $0xd0] sm:$0xff]
  %v598 = vld [vmem:[%s4 + $0xd8] sm:$0xff]
  %v599 = vmul.f32 %v593, %v595
  %v600 = vmul.f32 %v592, %v596
  %v601 = vmul.f32 %v591, %v597
  %v602 = vmul.f32 %v594, %v598
  %603 = vst [vmem:[#allocation2 + $0xc0] sm:$0xff] %v599
  %604 = vst [vmem:[#allocation2 + $0xc8] sm:$0xff] %v600
  %605 = vst [vmem:[#allocation2 + $0xd0] sm:$0xff] %v601
  %606 = vst [vmem:[#allocation2 + $0xd8] sm:$0xff] %v602
  %607 = vrot.lane.b32.xlu0 %v455, 112
  %v608 = vpop.permute.xlu0 %607
  %609 = vrot.lane.b32.xlu0 %v456, 112
  %v610 = vpop.permute.xlu0 %609
  %611 = vrot.lane.b32.xlu0 %v457, 112
  %v612 = vpop.permute.xlu0 %611
  %613 = vrot.lane.b32.xlu0 %v458, 112
  %v614 = vpop.permute.xlu0 %613
  %v615 = vsel %vm188, %v612, %v614
  %v616 = vsel %vm188, %v610, %v612
  %v617 = vsel %vm188, %v608, %v610
  %v618 = vsel %vm188, %v614, %v608
  %v619 = vld [vmem:[%s4 + $0xe0] sm:$0xff]
  %v620 = vld [vmem:[%s4 + $0xe8] sm:$0xff]
  %v621 = vld [vmem:[%s4 + $0xf0] sm:$0xff]
  %v622 = vld [vmem:[%s4 + $0xf8] sm:$0xff]
  %v623 = vmul.f32 %v617, %v619
  %v624 = vmul.f32 %v616, %v620
  %v625 = vmul.f32 %v615, %v621
  %v626 = vmul.f32 %v618, %v622
  %627 = vst [vmem:[#allocation2 + $0xe0] sm:$0xff] %v623
  %628 = vst [vmem:[#allocation2 + $0xe8] sm:$0xff] %v624
  %629 = vst [vmem:[#allocation2 + $0xf0] sm:$0xff] %v625
  %630 = vst [vmem:[#allocation2 + $0xf8] sm:$0xff] %v626
  %631 = vrot.lane.b32.xlu0 %v455, 111
  %v632 = vpop.permute.xlu0 %631
  %633 = vrot.lane.b32.xlu0 %v456, 111
  %v634 = vpop.permute.xlu0 %633
  %635 = vrot.lane.b32.xlu0 %v457, 111
  %v636 = vpop.permute.xlu0 %635
  %637 = vrot.lane.b32.xlu0 %v458, 111
  %v638 = vpop.permute.xlu0 %637
  %v639 = vsel %vm213, %v636, %v638
  %v640 = vsel %vm213, %v634, %v636
  %v641 = vsel %vm213, %v632, %v634
  %v642 = vsel %vm213, %v638, %v632
  %v643 = vld [vmem:[%s4 + $0x100] sm:$0xff]
  %v644 = vld [vmem:[%s4 + $0x108] sm:$0xff]
  %v645 = vld [vmem:[%s4 + $0x110] sm:$0xff]
  %v646 = vld [vmem:[%s4 + $0x118] sm:$0xff]
  %v647 = vmul.f32 %v641, %v643
  %v648 = vmul.f32 %v640, %v644
  %v649 = vmul.f32 %v639, %v645
  %v650 = vmul.f32 %v642, %v646
  %651 = vst [vmem:[#allocation2 + $0x100] sm:$0xff] %v647
  %652 = vst [vmem:[#allocation2 + $0x108] sm:$0xff] %v648
  %653 = vst [vmem:[#allocation2 + $0x110] sm:$0xff] %v649
  %654 = vst [vmem:[#allocation2 + $0x118] sm:$0xff] %v650
  %v655 = vld [vmem:[%s2] sm:$0xff]
  %v656 = vld [vmem:[#allocation2] sm:$0xff]
  %v657 = vld [vmem:[#allocation2 + $0x8] sm:$0xff]
  %v658 = vld [vmem:[#allocation2 + $0x10] sm:$0xff]
  %v659 = vld [vmem:[#allocation2 + $0x18] sm:$0xff]
  %v660 = vld [vmem:[#allocation2 + $0x20] sm:$0xff]
  %v661 = vld [vmem:[#allocation2 + $0x28] sm:$0xff]
  %v662 = vld [vmem:[#allocation2 + $0x30] sm:$0xff]
  %v663 = vld [vmem:[#allocation2 + $0x38] sm:$0xff]
  %v664 = vld [vmem:[#allocation2 + $0x40] sm:$0xff]
  %v665 = vld [vmem:[#allocation2 + $0x48] sm:$0xff]
  %v666 = vld [vmem:[#allocation2 + $0x50] sm:$0xff]
  %v667 = vld [vmem:[#allocation2 + $0x58] sm:$0xff]
  %v668 = vld [vmem:[#allocation2 + $0x60] sm:$0xff]
  %v669 = vld [vmem:[#allocation2 + $0x68] sm:$0xff]
  %v670 = vld [vmem:[#allocation2 + $0x70] sm:$0xff]
  %v671 = vld [vmem:[#allocation2 + $0x78] sm:$0xff]
  %v672 = vld [vmem:[#allocation2 + $0x80] sm:$0xff]
  %v673 = vld [vmem:[#allocation2 + $0x88] sm:$0xff]
  %v674 = vld [vmem:[#allocation2 + $0x90] sm:$0xff]
  %v675 = vld [vmem:[#allocation2 + $0x98] sm:$0xff]
  %v676 = vld [vmem:[#allocation2 + $0xa0] sm:$0xff]
  %v677 = vld [vmem:[#allocation2 + $0xa8] sm:$0xff]
  %v678 = vld [vmem:[#allocation2 + $0xb0] sm:$0xff]
  %v679 = vld [vmem:[#allocation2 + $0xb8] sm:$0xff]
  %v680 = vld [vmem:[#allocation2 + $0xc0] sm:$0xff]
  %v681 = vld [vmem:[#allocation2 + $0xc8] sm:$0xff]
  %v682 = vld [vmem:[#allocation2 + $0xd0] sm:$0xff]
  %v683 = vld [vmem:[#allocation2 + $0xd8] sm:$0xff]
  %v684 = vld [vmem:[#allocation2 + $0xe0] sm:$0xff]
  %v685 = vld [vmem:[#allocation2 + $0xe8] sm:$0xff]
  %v686 = vld [vmem:[#allocation2 + $0xf0] sm:$0xff]
  %v687 = vld [vmem:[#allocation2 + $0xf8] sm:$0xff]
  %v688 = vld [vmem:[#allocation2 + $0x100] sm:$0xff]
  %v689 = vld [vmem:[#allocation2 + $0x108] sm:$0xff]
  %v690 = vld [vmem:[#allocation2 + $0x110] sm:$0xff]
  %v691 = vld [vmem:[#allocation2 + $0x118] sm:$0xff]
  %v693 = vsel %vm267, %v655, 0
  %695 = vmatprep.subr.mxu0 %v657
  %696 = vmatpush1.msra.mxu0 %v656
  %697 = vmatprep.subr.mxu0 %v661
  %698 = vmatpush1.msra.mxu0 %v660
  %699 = vmatprep.subr.mxu0 %v665
  %700 = vmatpush1.msra.mxu0 %v664
  %701 = vmatprep.subr.mxu0 %v669
  %702 = vmatpush1.msra.mxu0 %v668
  %703 = vmatprep.subr.mxu0 %v673
  %704 = vmatpush1.msra.mxu0 %v672
  %705 = vmatprep.subr.mxu0 %v677
  %706 = vmatpush1.msra.mxu0 %v676
  %707 = vmatprep.subr.mxu0 %v681
  %708 = vmatpush1.msra.mxu0 %v680
  %709 = vmatprep.subr.mxu0 %v685
  %710 = vmatpush1.msra.mxu0 %v684
  %711 = vmatprep.subr.mxu0 %v689
  %712 = vmatpush1.msra.mxu0 %v688
  %713 = vmatprep.subr.mxu0 0.0
  %714 = vmatpush1.msra.mxu0 0.0
  %715 = vmatprep.subr.mxu0 0.0
  %716 = vmatpush1.msra.mxu0 0.0
  %717 = vmatprep.subr.mxu0 0.0
  %718 = vmatpush1.msra.mxu0 0.0
  %719 = vmatprep.subr.mxu0 0.0
  %720 = vmatpush1.msra.mxu0 0.0
  %721 = vmatprep.subr.mxu0 0.0
  %722 = vmatpush1.msra.mxu0 0.0
  %723 = vmatprep.subr.mxu0 0.0
  %724 = vmatpush1.msra.mxu0 0.0
  %725 = vmatprep.subr.mxu0 0.0
  %726 = vmatpush1.msra.mxu0 0.0
  %727 = vmatprep.subr.mxu0 0.0
  %728 = vmatpush1.msra.mxu0 0.0
  %729 = vmatprep.subr.mxu0 0.0
  %730 = vmatpush1.msra.mxu0 0.0
  %731 = vmatprep.subr.mxu0 0.0
  %732 = vmatpush1.msra.mxu0 0.0
  %733 = vmatprep.subr.mxu0 0.0
  %734 = vmatpush1.msra.mxu0 0.0
  %735 = vmatprep.subr.mxu0 0.0
  %736 = vmatpush1.msra.mxu0 0.0
  %737 = vmatprep.subr.mxu0 0.0
  %738 = vmatpush1.msra.mxu0 0.0
  %739 = vmatprep.subr.mxu0 0.0
  %740 = vmatpush1.msra.mxu0 0.0
  %741 = vmatprep.subr.mxu0 0.0
  %742 = vmatpush1.msra.mxu0 0.0
  %743 = vmatprep.subr.mxu0 0.0
  %744 = vmatpush1.msra.mxu0 0.0
  %745 = vmatprep.subr.mxu0 0.0
  %746 = vmatpush1.msra.mxu0 0.0
  %747 = vmatprep.subr.mxu0 0.0
  %748 = vmatpush1.msra.mxu0 0.0
  %749 = vmatprep.subr.mxu0 0.0
  %750 = vmatpush1.msra.mxu0 0.0
  %751 = vmatprep.subr.mxu0 0.0
  %752 = vmatpush1.msra.mxu0 0.0
  %753 = vmatprep.subr.mxu0 0.0
  %754 = vmatpush1.msra.mxu0 0.0
  %755 = vmatprep.subr.mxu0 0.0
  %756 = vmatpush1.msra.mxu0 0.0
  %757 = vmatprep.subr.mxu0 0.0
  %758 = vmatpush1.msra.mxu0 0.0
  %759 = vmatprep.mubr.f32.mxu0 0.0
  %760 = vmatmul.mubr.f32.gmra.mrb[0].mxu0 %v693
  %v761 = vpop.f32.mrb[0].mxu0
  %v762 = vadd.f32 0.0, %v761
  %v763 = vpop.f32.mrb[0].mxu0
  %v764 = vadd.f32 0.0, %v763
  %765 = vdwg.mxu0
  %766 = vmatprep.subr.mxu0 %v659
  %767 = vmatpush1.msra.mxu0 %v658
  %768 = vmatprep.subr.mxu0 %v663
  %769 = vmatpush1.msra.mxu0 %v662
  %770 = vmatprep.subr.mxu0 %v667
  %771 = vmatpush1.msra.mxu0 %v666
  %772 = vmatprep.subr.mxu0 %v671
  %773 = vmatpush1.msra.mxu0 %v670
  %774 = vmatprep.subr.mxu0 %v675
  %775 = vmatpush1.msra.mxu0 %v674
  %776 = vmatprep.subr.mxu0 %v679
  %777 = vmatpush1.msra.mxu0 %v678
  %778 = vmatprep.subr.mxu0 %v683
  %779 = vmatpush1.msra.mxu0 %v682
  %780 = vmatprep.subr.mxu0 %v687
  %781 = vmatpush1.msra.mxu0 %v686
  %782 = vmatprep.subr.mxu0 %v691
  %783 = vmatpush1.msra.mxu0 %v690
  %784 = vmatprep.subr.mxu0 0.0
  %785 = vmatpush1.msra.mxu0 0.0
  %786 = vmatprep.subr.mxu0 0.0
  %787 = vmatpush1.msra.mxu0 0.0
  %788 = vmatprep.subr.mxu0 0.0
  %789 = vmatpush1.msra.mxu0 0.0
  %790 = vmatprep.subr.mxu0 0.0
  %791 = vmatpush1.msra.mxu0 0.0
  %792 = vmatprep.subr.mxu0 0.0
  %793 = vmatpush1.msra.mxu0 0.0
  %794 = vmatprep.subr.mxu0 0.0
  %795 = vmatpush1.msra.mxu0 0.0
  %796 = vmatprep.subr.mxu0 0.0
  %797 = vmatpush1.msra.mxu0 0.0
  %798 = vmatprep.subr.mxu0 0.0
  %799 = vmatpush1.msra.mxu0 0.0
  %800 = vmatprep.subr.mxu0 0.0
  %801 = vmatpush1.msra.mxu0 0.0
  %802 = vmatprep.subr.mxu0 0.0
  %803 = vmatpush1.msra.mxu0 0.0
  %804 = vmatprep.subr.mxu0 0.0
  %805 = vmatpush1.msra.mxu0 0.0
  %806 = vmatprep.subr.mxu0 0.0
  %807 = vmatpush1.msra.mxu0 0.0
  %808 = vmatprep.subr.mxu0 0.0
  %809 = vmatpush1.msra.mxu0 0.0
  %810 = vmatprep.subr.mxu0 0.0
  %811 = vmatpush1.msra.mxu0 0.0
  %812 = vmatprep.subr.mxu0 0.0
  %813 = vmatpush1.msra.mxu0 0.0
  %814 = vmatprep.subr.mxu0 0.0
  %815 = vmatpush1.msra.mxu0 0.0
  %816 = vmatprep.subr.mxu0 0.0
  %817 = vmatpush1.msra.mxu0 0.0
  %818 = vmatprep.subr.mxu0 0.0
  %819 = vmatpush1.msra.mxu0 0.0
  %820 = vmatprep.subr.mxu0 0.0
  %821 = vmatpush1.msra.mxu0 0.0
  %822 = vmatprep.subr.mxu0 0.0
  %823 = vmatpush1.msra.mxu0 0.0
  %824 = vmatprep.subr.mxu0 0.0
  %825 = vmatpush1.msra.mxu0 0.0
  %826 = vmatprep.subr.mxu0 0.0
  %827 = vmatpush1.msra.mxu0 0.0
  %828 = vmatprep.subr.mxu0 0.0
  %829 = vmatpush1.msra.mxu0 0.0
  %830 = vmatprep.mubr.f32.mxu0 0.0
  %831 = vmatmul.mubr.f32.gmra.mrb[0].mxu0 %v693
  %v832 = vpop.f32.mrb[0].mxu0
  %v833 = vadd.f32 0.0, %v832
  %v834 = vpop.f32.mrb[0].mxu0
  %v835 = vadd.f32 0.0, %v834
  %836 = vdwg.mxu0
  %v837 = vld [vmem:[%s3] sm:$0xff]
  %v838 = vadd.f32 %v762, %v764
  %v839 = vadd.f32 %v838, %v833
  %v840 = vadd.f32 %v839, %v835
  %841 = vadd.xlane.f32.xlu0 %v840
  %v842 = vpop.xlane.xlu0 %841
  %v843 = vmul.f32 %v842, 0.001953125
  %v844 = vsub.f32 %v762, %v843
  %v845 = vsub.f32 %v764, %v843
  %v846 = vsub.f32 %v833, %v843
  %v847 = vsub.f32 %v835, %v843
  %v848 = vmul.f32 %v844, %v844
  %v849 = vmul.f32 %v845, %v845
  %v850 = vmul.f32 %v846, %v846
  %v851 = vmul.f32 %v847, %v847
  %v852 = vadd.f32 %v848, %v849
  %v853 = vadd.f32 %v852, %v850
  %v854 = vadd.f32 %v853, %v851
  %855 = vadd.xlane.f32.xlu0 %v854
  %v856 = vpop.xlane.xlu0 %855
  %v857 = vmul.f32 %v856, 0.001953125
  %v858 = vadd.f32 %v857, 1e-05
  %v859 = vrsqrt.pop %v858
  %v860 = vmul.f32 %v837, %v859
  %862 = vset.pattern.permute.xlu0 2
  %863 = vperm.xlu0 %862, %v860
  %v864 = vpop.permute.xlu0 %863
  %v866 = vmul.f32 %v844, %v864
  %v867 = vmul.f32 %v845, %v864
  %v868 = vmul.f32 %v846, %v864
  %v869 = vmul.f32 %v847, %v864
  %871 = vset.pattern.permute.xlu0 3
  %872 = vperm.xlu0 %871, %v837
  %v873 = vpop.permute.xlu0 %872
  %v875 = vadd.f32 %v866, %v873
  %v876 = vadd.f32 %v867, %v873
  %v877 = vadd.f32 %v868, %v873
  %v878 = vadd.f32 %v869, %v873
  %v879 = vmax.f32 %v875, 0.0
  %v880 = vmax.f32 %v876, 0.0
  %v881 = vmax.f32 %v877, 0.0
  %v882 = vmax.f32 %v878, 0.0
  %883 = vst [vmem:[%s5] sm:$0xff] %v879
  %884 = vst [vmem:[%s5 + $0x8] sm:$0xff] %v880
  %885 = vst [vmem:[%s5 + $0x10] sm:$0xff] %v881
  %886 = vst [vmem:[%s5 + $0x18] sm:$0xff] %v882
  // Predicated region
  $region22: #{double_conv.1} parent=0 // pred_check
    _
  $region23: #{double_conv.1} parent=0 // pred_check_branch
    %888 = sbr.rel (0) target = $region25
  $region24: #{double_conv.1} parent=0 // pred_region
    _
  $region25: #{double_conv.1} parent=0 // pred_fallthru
    _
  // Predicated region
  $region26: #{double_conv.1} parent=0 // pred_check
    _
  $region27: #{double_conv.1} parent=0 // pred_check_branch
    %890 = sbr.rel (0) target = $region29
  $region28: #{double_conv.1} parent=0 // pred_region
    _
  $region29: #{double_conv.1} parent=0 // pred_fallthru
    _

</llo_original>
